<compile_context>
chip_gen: v6e
topology: v6e:2x2x1
jax: 0.10.0
libtpu: 0.0.40
codegen_flags: <defaults>
</compile_context>

<pallas_src>
import functools

import jax
import jax.numpy as jnp
from jax.experimental import pallas as pl
from jax.experimental.pallas import tpu as pltpu


def _round_up(x, m):
    return ((x + m - 1) // m) * m


def _pick_edge_tile(E, D, itemsize):
    """Choose the edge-tile (rows per grid step) from a VMEM budget."""
    # Sublane packing granularity: 8 rows/vreg for 32-bit, 16 for 16-bit, 32 for 8-bit.
    row_mult = max(8, 32 // max(1, itemsize))
    # Budget for the in-flight input streams: 2 inputs x 2 pipeline buffers.
    budget_bytes = 12 * 1024 * 1024
    te = budget_bytes // max(1, 4 * D * itemsize)
    te = max(row_mult, min(int(te), 2048))
    te = (te // row_mult) * row_mult
    # No point making the tile wider than the (rounded-up) edge count.
    te = min(te, _round_up(E, row_mult))
    return int(te)


def _inner_product_kernel(zu_ref, zv_ref, o_ref, *, apply_sigmoid):
    # zu_ref, zv_ref: (TE, D) VMEM tiles of gathered endpoint embeddings.
    # o_ref: (TE, 1) per-edge inner products.
    # Accumulate in f32 regardless of input dtype; cast only at the final store.
    prod = zu_ref[...].astype(jnp.float32) * zv_ref[...].astype(jnp.float32)
    val = jnp.sum(prod, axis=-1, keepdims=True)
    if apply_sigmoid:
        # Fused sigmoid: exp/div go to the EUP slot, which is idle in this kernel.
        val = 1.0 / (1.0 + jnp.exp(-val))
    o_ref[...] = val.astype(o_ref.dtype)


def inner_product_decode(z, edge_index, sigmoid=False, *, te=None):
    """Pallas-backed InnerProductDecoder.forward(z, edge_index, sigmoid)."""
    z = jnp.asarray(z)
    edge_index = jnp.asarray(edge_index)

    # Gather endpoints (glue, stays in XLA).  The reduction hot path runs in
    # the Pallas kernel.
    zu = jnp.take(z, edge_index[0], axis=0)   # [E, D]
    zv = jnp.take(z, edge_index[1], axis=0)   # [E, D]
    E, D = zu.shape

    if E == 0:
        return jnp.zeros((0,), dtype=z.dtype)

    itemsize = jnp.dtype(z.dtype).itemsize
    row_mult = max(8, 32 // max(1, itemsize))
    if te is None:
        te = _pick_edge_tile(E, D, itemsize)
    else:
        te = max(row_mult, (int(te) // row_mult) * row_mult)

    grid = (pl.cdiv(E, te),)

    kernel = functools.partial(_inner_product_kernel, apply_sigmoid=bool(sigmoid))

    out = pl.pallas_call(
        kernel,
        out_shape=jax.ShapeDtypeStruct((E, 1), z.dtype),
        grid_spec=pltpu.PrefetchScalarGridSpec(
            num_scalar_prefetch=0,
            grid=grid,
            in_specs=[
                pl.BlockSpec((te, D), lambda i: (i, 0)),
                pl.BlockSpec((te, D), lambda i: (i, 0)),
            ],
            out_specs=pl.BlockSpec((te, 1), lambda i: (i, 0)),
        ),
        compiler_params=pltpu.CompilerParams(
            dimension_semantics=("parallel",),
            # Large enough for the double-buffered tiles on v5e (16 MiB default
            # scoped limit), small enough to fit v7x's 64 MiB physical VMEM.
            vmem_limit_bytes=48 * 1024 * 1024,
        ),
    )(zu, zv)

    return out[:, 0]  # [E]


class Decoder:
    """Mirror of the PyTorch Decoder module (no parameters)."""

    def __call__(self, z, edge_index, sigmoid=False):
        return inner_product_decode(z, edge_index, sigmoid=sigmoid)


if __name__ == "__main__":
    key = jax.random.PRNGKey(0)
    k_z, k_e = jax.random.split(key)

    # Small shapes: 64 nodes, 128-dim embeddings (lane-dense), 300 edges
    # (exercises the ragged last block).
    N, D, E = 64, 128, 300
    z = jax.random.normal(k_z, (N, D), dtype=jnp.float32)
    edge_index = jax.random.randint(k_e, (2, E), 0, N, dtype=jnp.int32)

    decoder = Decoder()
    out = decoder(z, edge_index, sigmoid=False)          # default (single big tile)
    out_sig = decoder(z, edge_index, sigmoid=True)        # fused sigmoid path
    out_tiled = inner_product_decode(z, edge_index, sigmoid=False, te=128)  # multi-tile + ragged tail
    jax.block_until_ready((out, out_sig, out_tiled))

    # Pure-JAX reference for correctness check.
    ref = jnp.sum(z[edge_index[0]] * z[edge_index[1]], axis=1)
    assert out.shape == (E,), out.shape
    assert jnp.allclose(out, ref, atol=1e-5, rtol=1e-5)
    assert jnp.allclose(out_tiled, ref, atol=1e-5, rtol=1e-5)
    assert jnp.allclose(out_sig, jax.nn.sigmoid(ref), atol=1e-5, rtol=1e-5)

    print("KERNEL_OK")
</pallas_src>

<mosaic_0001>
module attributes {stable_mosaic.version = 11 : i64} {
  func.func @_inner_product_kernel(%arg0: i32, %arg1: memref<304x128xf32, #tpu.memory_space<vmem>>, %arg2: memref<304x128xf32, #tpu.memory_space<vmem>>, %arg3: memref<304x1xf32, #tpu.memory_space<vmem>>) attributes {dimension_semantics = [#tpu.dimension_semantics<parallel>], iteration_bounds = array<i64: 1>, scalar_prefetch = 0 : i64, scratch_operands = 0 : i64, tpu.core_type = #tpu.core_type<tc>, window_params = [{transform_indices = @transform_0, window_bounds = array<i64: 304, 128>}, {transform_indices = @transform_1, window_bounds = array<i64: 304, 128>}, {transform_indices = @transform_2, window_bounds = array<i64: 304, 1>}]} {
    %c0 = arith.constant 0 : index
    %c0_0 = arith.constant 0 : index
    %0 = vector.load %arg1[%c0, %c0_0] : memref<304x128xf32, #tpu.memory_space<vmem>>, vector<304x128xf32>
    %c0_1 = arith.constant 0 : index
    %c0_2 = arith.constant 0 : index
    %1 = vector.load %arg2[%c0_1, %c0_2] : memref<304x128xf32, #tpu.memory_space<vmem>>, vector<304x128xf32>
    %2 = arith.mulf %0, %1 : vector<304x128xf32>
    %cst = arith.constant dense<0.000000e+00> : vector<304xf32>
    %3 = vector.multi_reduction <add>, %2, %cst [1] : vector<304x128xf32> to vector<304xf32>
    %4 = vector.shape_cast %3 : vector<304xf32> to vector<304x1xf32>
    %c0_3 = arith.constant 0 : index
    %c0_4 = arith.constant 0 : index
    %5 = vector.load %arg3[%c0_3, %c0_4] : memref<304x1xf32, #tpu.memory_space<vmem>>, vector<304x1xf32>
    tpu.vector_store %arg3[%c0_3, %c0_4], %4 {strides = array<i32>} : memref<304x1xf32, #tpu.memory_space<vmem>>, vector<304x1xf32>,
    return
  }
  func.func @transform_0(%arg0: i32) -> (i32, i32) {
    %c0_i32 = arith.constant 0 : i32
    %c0_i32_0 = arith.constant 0 : i32
    return %arg0, %c0_i32 : i32, i32
  }
  func.func @transform_1(%arg0: i32) -> (i32, i32) {
    %c0_i32 = arith.constant 0 : i32
    %c0_i32_0 = arith.constant 0 : i32
    return %arg0, %c0_i32 : i32, i32
  }
  func.func @transform_2(%arg0: i32) -> (i32, i32) {
    %c0_i32 = arith.constant 0 : i32
    %c0_i32_0 = arith.constant 0 : i32
    return %arg0, %c0_i32 : i32, i32
  }
}

</mosaic_0001>

<llo_original>
// kernel: tpu_custom_call.1
$region0: #{tpu_custom_call.1}
  #allocation0 [shape = 'u32[]', space=smem, size = 0x4, offset = 0x4, fixed_abs, tag = 'smem constant byte address 0x4 - core index']
  #allocation1 [shape = 'u32[144,128]{1,0:T(1,128)}', space=vmem, size = 0x12000, scoped, tag = 'internal scratch']
  %s0 = inlined_call_operand.hbm [shape: f32[300,128], index: 0, kind: input, shape index: {}]
  %s1 = inlined_call_operand.hbm [shape: f32[300,128], index: 1, kind: input, shape index: {}]
  %s2 = inlined_call_operand.vmem [shape: f32[300,1], index: 2, kind: output, shape index: {}]
  %s3 = sld [smem:[#allocation0]]
  $region26: #{tpu_custom_call.1} parent=0
    _
  %s5 = ssub.s32 1, %s3
  %s6 = scalar_select 0, %s5, %s3
  $region1: #{tpu_custom_call.1} parent=0
    #allocation2 [shape = 'u8[155648]{0}', space=vmem, size = 0x26000, scoped, tag = 'input window, operand 0, single buffered']
    #allocation3 [shape = 's32[1]{0}', space=sflag, size = 0x4, scoped, tag = 'scoped memory for tpu_custom_call.1']
    #allocation4 [shape = 'u8[155648]{0}', space=vmem, size = 0x26000, scoped, tag = 'input window, operand 1, single buffered']
    #allocation5 [shape = 's32[1]{0}', space=sflag, size = 0x4, scoped, tag = 'scoped memory for tpu_custom_call.1']
    %7 = vsyncpa [#allocation3], 0
    %8 = vsyncpa [#allocation5], 0
    // Predicated region
    $region2: #{tpu_custom_call.1} parent=1 // pred_check
      _
    $region3: #{tpu_custom_call.1} parent=1 // pred_check_branch
      %10 = sbr.rel (0) target = $region5
    $region4: #{tpu_custom_call.1} parent=1 // pred_region
      %s12 = ssub.s32 4864, 4864
      %13 = vsyncadd [#allocation3], %s12
      %s14 = sshll.u32 [#allocation2], 4
      %s15 = int_to_ptr.vmem [resolvable:$true] %s14
      %20 = dma.hbm_to_vmem [thread:$0]  %s0, 4864, %s15, [#allocation3], 128, 128, 8
    $region5: #{tpu_custom_call.1} parent=1 // pred_fallthru
      _
    // Predicated region
    $region6: #{tpu_custom_call.1} parent=1 // pred_check
      _
    $region7: #{tpu_custom_call.1} parent=1 // pred_check_branch
      %22 = sbr.rel (0) target = $region9
    $region8: #{tpu_custom_call.1} parent=1 // pred_region
      %s24 = ssub.s32 4864, 4864
      %25 = vsyncadd [#allocation5], %s24
      %s26 = sshll.u32 [#allocation4], 4
      %s27 = int_to_ptr.vmem [resolvable:$true] %s26
      %32 = dma.hbm_to_vmem [thread:$0]  %s1, 4864, %s27, [#allocation5], 128, 128, 8
    $region9: #{tpu_custom_call.1} parent=1 // pred_fallthru
      _
    // Predicated region
    $region10: #{tpu_custom_call.1} parent=1 // pred_check
      _
    $region11: #{tpu_custom_call.1} parent=1 // pred_check_branch
      %34 = sbr.rel (0) target = $region13
    $region12: #{tpu_custom_call.1} parent=1 // pred_region
      %35 = dma.done [#allocation3], 4864
    $region13: #{tpu_custom_call.1} parent=1 // pred_fallthru
      _
    // Predicated region
    $region14: #{tpu_custom_call.1} parent=1 // pred_check
      _
    $region15: #{tpu_custom_call.1} parent=1 // pred_check_branch
      %37 = sbr.rel (0) target = $region17
    $region16: #{tpu_custom_call.1} parent=1 // pred_region
      %38 = dma.done [#allocation5], 4864
    $region17: #{tpu_custom_call.1} parent=1 // pred_fallthru
      _
    %v39 = vld [vmem:[#allocation2] sm:$0xff]
    %v40 = vld [vmem:[#allocation2 + $0x8] sm:$0xff]
    %v41 = vld [vmem:[#allocation2 + $0x10] sm:$0xff]
    %v42 = vld [vmem:[#allocation2 + $0x18] sm:$0xff]
    %v43 = vld [vmem:[#allocation2 + $0x20] sm:$0xff]
    %v44 = vld [vmem:[#allocation2 + $0x28] sm:$0xff]
    %v45 = vld [vmem:[#allocation2 + $0x30] sm:$0xff]
    %v46 = vld [vmem:[#allocation2 + $0x38] sm:$0xff]
    %v47 = vld [vmem:[#allocation2 + $0x40] sm:$0xff]
    %v48 = vld [vmem:[#allocation2 + $0x48] sm:$0xff]
    %v49 = vld [vmem:[#allocation2 + $0x50] sm:$0xff]
    %v50 = vld [vmem:[#allocation2 + $0x58] sm:$0xff]
    %v51 = vld [vmem:[#allocation2 + $0x60] sm:$0xff]
    %v52 = vld [vmem:[#allocation2 + $0x68] sm:$0xff]
    %v53 = vld [vmem:[#allocation2 + $0x70] sm:$0xff]
    %v54 = vld [vmem:[#allocation2 + $0x78] sm:$0xff]
    %v55 = vld [vmem:[#allocation2 + $0x80] sm:$0xff]
    %v56 = vld [vmem:[#allocation2 + $0x88] sm:$0xff]
    %v57 = vld [vmem:[#allocation2 + $0x90] sm:$0xff]
    %v58 = vld [vmem:[#allocation2 + $0x98] sm:$0xff]
    %v59 = vld [vmem:[#allocation2 + $0xa0] sm:$0xff]
    %v60 = vld [vmem:[#allocation2 + $0xa8] sm:$0xff]
    %v61 = vld [vmem:[#allocation2 + $0xb0] sm:$0xff]
    %v62 = vld [vmem:[#allocation2 + $0xb8] sm:$0xff]
    %v63 = vld [vmem:[#allocation2 + $0xc0] sm:$0xff]
    %v64 = vld [vmem:[#allocation2 + $0xc8] sm:$0xff]
    %v65 = vld [vmem:[#allocation2 + $0xd0] sm:$0xff]
    %v66 = vld [vmem:[#allocation2 + $0xd8] sm:$0xff]
    %v67 = vld [vmem:[#allocation2 + $0xe0] sm:$0xff]
    %v68 = vld [vmem:[#allocation2 + $0xe8] sm:$0xff]
    %v69 = vld [vmem:[#allocation2 + $0xf0] sm:$0xff]
    %v70 = vld [vmem:[#allocation2 + $0xf8] sm:$0xff]
    %v71 = vld [vmem:[#allocation2 + $0x100] sm:$0xff]
    %v72 = vld [vmem:[#allocation2 + $0x108] sm:$0xff]
    %v73 = vld [vmem:[#allocation2 + $0x110] sm:$0xff]
    %v74 = vld [vmem:[#allocation2 + $0x118] sm:$0xff]
    %v75 = vld [vmem:[#allocation2 + $0x120] sm:$0xff]
    %v76 = vld [vmem:[#allocation2 + $0x128] sm:$0xff]
    %v77 = vld [vmem:[#allocation4] sm:$0xff]
    %v78 = vld [vmem:[#allocation4 + $0x8] sm:$0xff]
    %v79 = vld [vmem:[#allocation4 + $0x10] sm:$0xff]
    %v80 = vld [vmem:[#allocation4 + $0x18] sm:$0xff]
    %v81 = vld [vmem:[#allocation4 + $0x20] sm:$0xff]
    %v82 = vld [vmem:[#allocation4 + $0x28] sm:$0xff]
    %v83 = vld [vmem:[#allocation4 + $0x30] sm:$0xff]
    %v84 = vld [vmem:[#allocation4 + $0x38] sm:$0xff]
    %v85 = vld [vmem:[#allocation4 + $0x40] sm:$0xff]
    %v86 = vld [vmem:[#allocation4 + $0x48] sm:$0xff]
    %v87 = vld [vmem:[#allocation4 + $0x50] sm:$0xff]
    %v88 = vld [vmem:[#allocation4 + $0x58] sm:$0xff]
    %v89 = vld [vmem:[#allocation4 + $0x60] sm:$0xff]
    %v90 = vld [vmem:[#allocation4 + $0x68] sm:$0xff]
    %v91 = vld [vmem:[#allocation4 + $0x70] sm:$0xff]
    %v92 = vld [vmem:[#allocation4 + $0x78] sm:$0xff]
    %v93 = vld [vmem:[#allocation4 + $0x80] sm:$0xff]
    %v94 = vld [vmem:[#allocation4 + $0x88] sm:$0xff]
    %v95 = vld [vmem:[#allocation4 + $0x90] sm:$0xff]
    %v96 = vld [vmem:[#allocation4 + $0x98] sm:$0xff]
    %v97 = vld [vmem:[#allocation4 + $0xa0] sm:$0xff]
    %v98 = vld [vmem:[#allocation4 + $0xa8] sm:$0xff]
    %v99 = vld [vmem:[#allocation4 + $0xb0] sm:$0xff]
    %v100 = vld [vmem:[#allocation4 + $0xb8] sm:$0xff]
    %v101 = vld [vmem:[#allocation4 + $0xc0] sm:$0xff]
    %v102 = vld [vmem:[#allocation4 + $0xc8] sm:$0xff]
    %v103 = vld [vmem:[#allocation4 + $0xd0] sm:$0xff]
    %v104 = vld [vmem:[#allocation4 + $0xd8] sm:$0xff]
    %v105 = vld [vmem:[#allocation4 + $0xe0] sm:$0xff]
    %v106 = vld [vmem:[#allocation4 + $0xe8] sm:$0xff]
    %v107 = vld [vmem:[#allocation4 + $0xf0] sm:$0xff]
    %v108 = vld [vmem:[#allocation4 + $0xf8] sm:$0xff]
    %v109 = vld [vmem:[#allocation4 + $0x100] sm:$0xff]
    %v110 = vld [vmem:[#allocation4 + $0x108] sm:$0xff]
    %v111 = vld [vmem:[#allocation4 + $0x110] sm:$0xff]
    %v112 = vld [vmem:[#allocation4 + $0x118] sm:$0xff]
    %v113 = vld [vmem:[#allocation4 + $0x120] sm:$0xff]
    %v114 = vld [vmem:[#allocation4 + $0x128] sm:$0xff]
    %v115 = vmul.f32 %v39, %v77
    %v116 = vmul.f32 %v40, %v78
    %v117 = vmul.f32 %v41, %v79
    %v118 = vmul.f32 %v42, %v80
    %v119 = vmul.f32 %v43, %v81
    %v120 = vmul.f32 %v44, %v82
    %v121 = vmul.f32 %v45, %v83
    %v122 = vmul.f32 %v46, %v84
    %v123 = vmul.f32 %v47, %v85
    %v124 = vmul.f32 %v48, %v86
    %v125 = vmul.f32 %v49, %v87
    %v126 = vmul.f32 %v50, %v88
    %v127 = vmul.f32 %v51, %v89
    %v128 = vmul.f32 %v52, %v90
    %v129 = vmul.f32 %v53, %v91
    %v130 = vmul.f32 %v54, %v92
    %v131 = vmul.f32 %v55, %v93
    %v132 = vmul.f32 %v56, %v94
    %v133 = vmul.f32 %v57, %v95
    %v134 = vmul.f32 %v58, %v96
    %v135 = vmul.f32 %v59, %v97
    %v136 = vmul.f32 %v60, %v98
    %v137 = vmul.f32 %v61, %v99
    %v138 = vmul.f32 %v62, %v100
    %v139 = vmul.f32 %v63, %v101
    %v140 = vmul.f32 %v64, %v102
    %v141 = vmul.f32 %v65, %v103
    %v142 = vmul.f32 %v66, %v104
    %v143 = vmul.f32 %v67, %v105
    %v144 = vmul.f32 %v68, %v106
    %v145 = vmul.f32 %v69, %v107
    %v146 = vmul.f32 %v70, %v108
    %v147 = vmul.f32 %v71, %v109
    %v148 = vmul.f32 %v72, %v110
    %v149 = vmul.f32 %v73, %v111
    %v150 = vmul.f32 %v74, %v112
    %v151 = vmul.f32 %v75, %v113
    %v152 = vmul.f32 %v76, %v114
    %153 = vadd.xlane.f32.xlu0 %v115
    %v154 = vpop.xlane.xlu0 %153
    %155 = vadd.xlane.f32.xlu0 %v116
    %v156 = vpop.xlane.xlu0 %155
    %157 = vadd.xlane.f32.xlu0 %v117
    %v158 = vpop.xlane.xlu0 %157
    %159 = vadd.xlane.f32.xlu0 %v118
    %v160 = vpop.xlane.xlu0 %159
    %161 = vadd.xlane.f32.xlu0 %v119
    %v162 = vpop.xlane.xlu0 %161
    %163 = vadd.xlane.f32.xlu0 %v120
    %v164 = vpop.xlane.xlu0 %163
    %165 = vadd.xlane.f32.xlu0 %v121
    %v166 = vpop.xlane.xlu0 %165
    %167 = vadd.xlane.f32.xlu0 %v122
    %v168 = vpop.xlane.xlu0 %167
    %169 = vadd.xlane.f32.xlu0 %v123
    %v170 = vpop.xlane.xlu0 %169
    %171 = vadd.xlane.f32.xlu0 %v124
    %v172 = vpop.xlane.xlu0 %171
    %173 = vadd.xlane.f32.xlu0 %v125
    %v174 = vpop.xlane.xlu0 %173
    %175 = vadd.xlane.f32.xlu0 %v126
    %v176 = vpop.xlane.xlu0 %175
    %177 = vadd.xlane.f32.xlu0 %v127
    %v178 = vpop.xlane.xlu0 %177
    %179 = vadd.xlane.f32.xlu0 %v128
    %v180 = vpop.xlane.xlu0 %179
    %181 = vadd.xlane.f32.xlu0 %v129
    %v182 = vpop.xlane.xlu0 %181
    %183 = vadd.xlane.f32.xlu0 %v130
    %v184 = vpop.xlane.xlu0 %183
    %185 = vadd.xlane.f32.xlu0 %v131
    %v186 = vpop.xlane.xlu0 %185
    %187 = vadd.xlane.f32.xlu0 %v132
    %v188 = vpop.xlane.xlu0 %187
    %189 = vadd.xlane.f32.xlu0 %v133
    %v190 = vpop.xlane.xlu0 %189
    %191 = vadd.xlane.f32.xlu0 %v134
    %v192 = vpop.xlane.xlu0 %191
    %193 = vadd.xlane.f32.xlu0 %v135
    %v194 = vpop.xlane.xlu0 %193
    %195 = vadd.xlane.f32.xlu0 %v136
    %v196 = vpop.xlane.xlu0 %195
    %197 = vadd.xlane.f32.xlu0 %v137
    %v198 = vpop.xlane.xlu0 %197
    %199 = vadd.xlane.f32.xlu0 %v138
    %v200 = vpop.xlane.xlu0 %199
    %201 = vadd.xlane.f32.xlu0 %v139
    %v202 = vpop.xlane.xlu0 %201
    %203 = vadd.xlane.f32.xlu0 %v140
    %v204 = vpop.xlane.xlu0 %203
    %205 = vadd.xlane.f32.xlu0 %v141
    %v206 = vpop.xlane.xlu0 %205
    %207 = vadd.xlane.f32.xlu0 %v142
    %v208 = vpop.xlane.xlu0 %207
    %209 = vadd.xlane.f32.xlu0 %v143
    %v210 = vpop.xlane.xlu0 %209
    %211 = vadd.xlane.f32.xlu0 %v144
    %v212 = vpop.xlane.xlu0 %211
    %213 = vadd.xlane.f32.xlu0 %v145
    %v214 = vpop.xlane.xlu0 %213
    %215 = vadd.xlane.f32.xlu0 %v146
    %v216 = vpop.xlane.xlu0 %215
    %217 = vadd.xlane.f32.xlu0 %v147
    %v218 = vpop.xlane.xlu0 %217
    %219 = vadd.xlane.f32.xlu0 %v148
    %v220 = vpop.xlane.xlu0 %219
    %221 = vadd.xlane.f32.xlu0 %v149
    %v222 = vpop.xlane.xlu0 %221
    %223 = vadd.xlane.f32.xlu0 %v150
    %v224 = vpop.xlane.xlu0 %223
    %225 = vadd.xlane.f32.xlu0 %v151
    %v226 = vpop.xlane.xlu0 %225
    %227 = vadd.xlane.f32.xlu0 %v152
    %v228 = vpop.xlane.xlu0 %227
    %vm229 = vcmask 7168
    %230 = vst.msk [vmem:[%s2] sm:$0xff] %vm229, %v154
    %231 = vst.msk [vmem:[%s2 + $0x8] sm:$0xff] %vm229, %v156
    %232 = vst.msk [vmem:[%s2 + $0x10] sm:$0xff] %vm229, %v158
    %233 = vst.msk [vmem:[%s2 + $0x18] sm:$0xff] %vm229, %v160
    %234 = vst.msk [vmem:[%s2 + $0x20] sm:$0xff] %vm229, %v162
    %235 = vst.msk [vmem:[%s2 + $0x28] sm:$0xff] %vm229, %v164
    %236 = vst.msk [vmem:[%s2 + $0x30] sm:$0xff] %vm229, %v166
    %237 = vst.msk [vmem:[%s2 + $0x38] sm:$0xff] %vm229, %v168
    %238 = vst.msk [vmem:[%s2 + $0x40] sm:$0xff] %vm229, %v170
    %239 = vst.msk [vmem:[%s2 + $0x48] sm:$0xff] %vm229, %v172
    %240 = vst.msk [vmem:[%s2 + $0x50] sm:$0xff] %vm229, %v174
    %241 = vst.msk [vmem:[%s2 + $0x58] sm:$0xff] %vm229, %v176
    %242 = vst.msk [vmem:[%s2 + $0x60] sm:$0xff] %vm229, %v178
    %243 = vst.msk [vmem:[%s2 + $0x68] sm:$0xff] %vm229, %v180
    %244 = vst.msk [vmem:[%s2 + $0x70] sm:$0xff] %vm229, %v182
    %245 = vst.msk [vmem:[%s2 + $0x78] sm:$0xff] %vm229, %v184
    %246 = vst.msk [vmem:[%s2 + $0x80] sm:$0xff] %vm229, %v186
    %247 = vst.msk [vmem:[%s2 + $0x88] sm:$0xff] %vm229, %v188
    %248 = vst.msk [vmem:[%s2 + $0x90] sm:$0xff] %vm229, %v190
    %249 = vst.msk [vmem:[%s2 + $0x98] sm:$0xff] %vm229, %v192
    %250 = vst.msk [vmem:[%s2 + $0xa0] sm:$0xff] %vm229, %v194
    %251 = vst.msk [vmem:[%s2 + $0xa8] sm:$0xff] %vm229, %v196
    %252 = vst.msk [vmem:[%s2 + $0xb0] sm:$0xff] %vm229, %v198
    %253 = vst.msk [vmem:[%s2 + $0xb8] sm:$0xff] %vm229, %v200
    %254 = vst.msk [vmem:[%s2 + $0xc0] sm:$0xff] %vm229, %v202
    %255 = vst.msk [vmem:[%s2 + $0xc8] sm:$0xff] %vm229, %v204
    %256 = vst.msk [vmem:[%s2 + $0xd0] sm:$0xff] %vm229, %v206
    %257 = vst.msk [vmem:[%s2 + $0xd8] sm:$0xff] %vm229, %v208
    %258 = vst.msk [vmem:[%s2 + $0xe0] sm:$0xff] %vm229, %v210
    %259 = vst.msk [vmem:[%s2 + $0xe8] sm:$0xff] %vm229, %v212
    %260 = vst.msk [vmem:[%s2 + $0xf0] sm:$0xff] %vm229, %v214
    %261 = vst.msk [vmem:[%s2 + $0xf8] sm:$0xff] %vm229, %v216
    %262 = vst.msk [vmem:[%s2 + $0x100] sm:$0xff] %vm229, %v218
    %263 = vst.msk [vmem:[%s2 + $0x108] sm:$0xff] %vm229, %v220
    %264 = vst.msk [vmem:[%s2 + $0x110] sm:$0xff] %vm229, %v222
    %265 = vst.msk [vmem:[%s2 + $0x118] sm:$0xff] %vm229, %v224
    %266 = vst.msk [vmem:[%s2 + $0x120] sm:$0xff] %vm229, %v226
    %267 = vst.msk [vmem:[%s2 + $0x128] sm:$0xff] %vm229, %v228
    // Predicated region
    $region18: #{tpu_custom_call.1} parent=1 // pred_check
      _
    $region19: #{tpu_custom_call.1} parent=1 // pred_check_branch
      %269 = sbr.rel (0) target = $region21
    $region20: #{tpu_custom_call.1} parent=1 // pred_region
      _
    $region21: #{tpu_custom_call.1} parent=1 // pred_fallthru
      _
    // Predicated region
    $region22: #{tpu_custom_call.1} parent=1 // pred_check
      _
    $region23: #{tpu_custom_call.1} parent=1 // pred_check_branch
      %271 = sbr.rel (0) target = $region25
    $region24: #{tpu_custom_call.1} parent=1 // pred_region
      _
    $region25: #{tpu_custom_call.1} parent=1 // pred_fallthru
      _
    %272 = vsyncpa [#allocation3], 1
    %273 = vsyncpa [#allocation5], 1

</llo_original>
